<compile_context>
chip_gen: v7x
topology: tpu7x:2x2x1
jax: 0.10.0
libtpu: 0.0.40
codegen_flags: <defaults>
</compile_context>

<pallas_src>
import math

import jax
import jax.numpy as jnp
from jax.experimental import pallas as pl
from jax.experimental.pallas import tpu as pltpu


def _copy_kernel(x_ref, o_ref):
    # Identity copy of the current lane-dense block.
    o_ref[...] = x_ref[...]


# Lane width of the flattened slab: large multiple of 128 -> unmasked stores.
_LANE = 512
# Target block size; 4x (double-buffered in+out) stays far below the
# 16 MiB (v5e) / 32 MiB (v6e, v7x) default scoped-VMEM limits.
_TARGET_BLOCK_BYTES = 2 * 1024 * 1024


def _sublane_multiple(itemsize):
    # Dense vreg packing: f32 -> 8 rows, bf16 -> 16, int8/fp8 -> 32.
    return {1: 32, 2: 16}.get(itemsize, 8)


def _pallas_identity_copy(x):
    """On-chip identity copy of `x` via a lane-dense, large-tile Pallas kernel."""
    orig_shape = x.shape
    dtype = x.dtype
    itemsize = jnp.dtype(dtype).itemsize
    total = math.prod(orig_shape)
    sub = _sublane_multiple(itemsize)

    # Tentative row count of the (rows, _LANE) slab.
    rows0 = -(-total // _LANE)

    # Block rows: a multiple of the sublane packing, sized near the target
    # block bytes (but never more rows than we have).
    bytes_per_row = _LANE * itemsize
    block_rows = max(sub, (min(rows0, _TARGET_BLOCK_BYTES // bytes_per_row) // sub) * sub)
    # Keep >= 2 grid steps when the tensor is big enough so the parallel grid
    # axis can be sharded across v7x's 2 TensorCores.
    if rows0 >= 2 * sub and block_rows > rows0 // 2:
        block_rows = max(sub, ((rows0 // 2) // sub) * sub)

    # Pad the flat buffer so the slab divides exactly into (block_rows, _LANE)
    # blocks (avoids a degenerate masked/un-pipelined trailing block).
    quantum = block_rows * _LANE
    padded = -(-total // quantum) * quantum
    flat = x.reshape(total)
    if padded != total:
        flat = jnp.pad(flat, (0, padded - total))
    rows = padded // _LANE
    grid = rows // block_rows

    slab = flat.reshape(rows, _LANE)
    out = pl.pallas_call(
        _copy_kernel,
        out_shape=jax.ShapeDtypeStruct((rows, _LANE), dtype),
        grid=(grid,),
        in_specs=[pl.BlockSpec((block_rows, _LANE), lambda i: (i, 0))],
        out_specs=pl.BlockSpec((block_rows, _LANE), lambda i: (i, 0)),
        compiler_params=pltpu.CompilerParams(
            dimension_semantics=("parallel",),
            vmem_limit_bytes=32 * 1024 * 1024,
        ),
    )(slab)

    return out.reshape(padded)[:total].reshape(orig_shape)


class Reshape:
    """JAX/Pallas equivalent of the PyTorch Reshape module.

    By default this is a pure metadata reshape (zero data movement), exactly
    matching torch `.view` on a contiguous tensor.  Set `use_pallas_copy=True`
    to route the data through the optimized Pallas identity-copy kernel.
    """

    def __init__(self, shape, use_pallas_copy=False):
        self.shape = tuple(shape)
        self.use_pallas_copy = use_pallas_copy

    def __call__(self, x):
        B = x.shape[0]
        n_in = math.prod(x.shape[1:])
        n_out = math.prod(self.shape)
        assert n_in == n_out, f"cannot reshape {x.shape} to {(B,) + self.shape}"
        out_shape = (B,) + self.shape
        if not self.use_pallas_copy:
            # Zero-cost metadata reshape -- no kernel beats "no kernel".
            return x.reshape(out_shape)
        return _pallas_identity_copy(x).reshape(out_shape)


if __name__ == "__main__":
    key = jax.random.PRNGKey(0)
    # Small shapes consistent with a conv feature map: NCHW (2, 4, 16, 16).
    x = jax.random.normal(key, (2, 4, 16, 16), dtype=jnp.float32)

    # --- default zero-copy path (flatten conv features before a Linear) ---
    mod = Reshape((4 * 16 * 16,))
    y = mod(x)
    jax.block_until_ready(y)
    ref = x.reshape((x.shape[0],) + mod.shape)
    assert y.shape == (2, 1024)
    assert y.dtype == x.dtype
    assert bool(jnp.array_equal(y, ref))

    # --- explicit Pallas copy path (exercises the kernel) ---
    mod_pallas = Reshape((4 * 16 * 16,), use_pallas_copy=True)
    yp = mod_pallas(x)
    jax.block_until_ready(yp)
    assert yp.shape == (2, 1024)
    assert yp.dtype == x.dtype
    assert bool(jnp.array_equal(yp, ref))

    # Multi-dim target shape, e.g. (16, 8, 8), through the kernel path.
    mod2 = Reshape((16, 8, 8), use_pallas_copy=True)
    y2 = mod2(x)
    jax.block_until_ready(y2)
    ref2 = x.reshape((2, 16, 8, 8))
    assert y2.shape == (2, 16, 8, 8)
    assert bool(jnp.array_equal(y2, ref2))

    # Non-128-divisible feature count exercises the padded slab path.
    x3 = jax.random.normal(key, (2, 5, 7), dtype=jnp.float32)
    mod3 = Reshape((7, 5), use_pallas_copy=True)
    y3 = mod3(x3)
    jax.block_until_ready(y3)
    ref3 = x3.reshape((2, 7, 5))
    assert y3.shape == (2, 7, 5)
    assert bool(jnp.array_equal(y3, ref3))

    print("KERNEL_OK")
</pallas_src>

<mosaic_0001>
module attributes {stable_mosaic.version = 11 : i64} {
  func.func @_copy_kernel(%arg0: i32, %arg1: memref<8x512xf32, #tpu.memory_space<vmem>>, %arg2: memref<8x512xf32, #tpu.memory_space<vmem>>) attributes {dimension_semantics = [#tpu.dimension_semantics<parallel>], iteration_bounds = array<i64: 1>, scalar_prefetch = 0 : i64, scratch_operands = 0 : i64, tpu.core_type = #tpu.core_type<tc>, window_params = [{transform_indices = @transform_0, window_bounds = array<i64: 8, 512>}, {transform_indices = @transform_1, window_bounds = array<i64: 8, 512>}]} {
    %c0 = arith.constant 0 : index
    %c0_0 = arith.constant 0 : index
    %0 = vector.load %arg1[%c0, %c0_0] : memref<8x512xf32, #tpu.memory_space<vmem>>, vector<8x512xf32>
    %c0_1 = arith.constant 0 : index
    %c0_2 = arith.constant 0 : index
    %1 = vector.load %arg2[%c0_1, %c0_2] : memref<8x512xf32, #tpu.memory_space<vmem>>, vector<8x512xf32>
    tpu.vector_store %arg2[%c0_1, %c0_2], %0 {strides = array<i32>} : memref<8x512xf32, #tpu.memory_space<vmem>>, vector<8x512xf32>,
    return
  }
  func.func @transform_0(%arg0: i32) -> (i32, i32) {
    %c0_i32 = arith.constant 0 : i32
    %c0_i32_0 = arith.constant 0 : i32
    return %arg0, %c0_i32 : i32, i32
  }
  func.func @transform_1(%arg0: i32) -> (i32, i32) {
    %c0_i32 = arith.constant 0 : i32
    %c0_i32_0 = arith.constant 0 : i32
    return %arg0, %c0_i32 : i32, i32
  }
}

</mosaic_0001>

<llo_original>
// kernel: tpu_custom_call.1
$region0: #{tpu_custom_call.1}
  #allocation0 [shape = 'u32[]', space=smem, size = 0x4, offset = 0x4, fixed_abs, tag = 'smem constant byte address 0x4 - core index']
  #allocation1 [shape = 'u32[144,128]{1,0:T(1,128)}', space=vmem, size = 0x12000, scoped, tag = 'internal scratch']
  %s0 = inlined_call_operand.hbm [shape: f32[8,512], index: 0, kind: input, shape index: {}]
  %s1 = inlined_call_operand.hbm [shape: f32[8,512], index: 1, kind: output, shape index: {}]
  %s2 = sld [smem:[#allocation0]]
  $region18: #{tpu_custom_call.1} parent=0
    _
  %s4 = ssub.s32 1, %s2
  %s5 = scalar_select 0, %s4, %s2
  $region1: #{tpu_custom_call.1} parent=0
    #allocation2 [shape = 'u8[16384]{0}', space=vmem, size = 0x4000, scoped, tag = 'input window, operand 0, single buffered']
    #allocation3 [shape = 's32[1]{0}', space=sflag, size = 0x4, scoped, tag = 'scoped memory for tpu_custom_call.1']
    #allocation4 [shape = 's32[1]{0}', space=sflag, size = 0x4, scoped, tag = 'scoped memory for tpu_custom_call.1']
    #allocation5 [shape = 'u8[16384]{0}', space=vmem, size = 0x4000, scoped, tag = 'output window, operand 0, single buffered']
    %6 = vsyncpa [#allocation3], 0
    %7 = vsyncpa [#allocation4], 0
    // Predicated region
    $region2: #{tpu_custom_call.1} parent=1 // pred_check
      _
    $region3: #{tpu_custom_call.1} parent=1 // pred_check_branch
      %9 = sbr.rel (0) target = $region5
    $region4: #{tpu_custom_call.1} parent=1 // pred_region
      %s11 = ssub.s32 512, 512
      %12 = vsyncadd [#allocation3], %s11
      %s14 = sshll.u32 [#allocation2], 4
      %s15 = int_to_ptr.vmem [resolvable:$true] %s14
      %17 = dma.hbm_to_vmem [thread:$0]  %s0, 512, %s15, [#allocation3]
    $region5: #{tpu_custom_call.1} parent=1 // pred_fallthru
      _
    // Predicated region
    $region6: #{tpu_custom_call.1} parent=1 // pred_check
      _
    $region7: #{tpu_custom_call.1} parent=1 // pred_check_branch
      %19 = sbr.rel (0) target = $region9
    $region8: #{tpu_custom_call.1} parent=1 // pred_region
      %20 = dma.done [#allocation3], 512
    $region9: #{tpu_custom_call.1} parent=1 // pred_fallthru
      _
    %v21 = vld [vmem:[#allocation2] sm:$0xff]
    %v22 = vld [vmem:[#allocation2 + $0x8] sm:$0xff]
    %v23 = vld [vmem:[#allocation2 + $0x10] sm:$0xff]
    %v24 = vld [vmem:[#allocation2 + $0x18] sm:$0xff]
    %25 = vst [vmem:[#allocation5] sm:$0xff] %v21
    %26 = vst [vmem:[#allocation5 + $0x8] sm:$0xff] %v22
    %27 = vst [vmem:[#allocation5 + $0x10] sm:$0xff] %v23
    %28 = vst [vmem:[#allocation5 + $0x18] sm:$0xff] %v24
    // Predicated region
    $region10: #{tpu_custom_call.1} parent=1 // pred_check
      _
    $region11: #{tpu_custom_call.1} parent=1 // pred_check_branch
      %30 = sbr.rel (0) target = $region13
    $region12: #{tpu_custom_call.1} parent=1 // pred_region
      %s32 = ssub.s32 512, 512
      %33 = vsyncadd [#allocation4], %s32
      %s35 = sshll.u32 [#allocation5], 4
      %s36 = int_to_ptr.vmem [resolvable:$true] %s35
      %38 = dma.vmem_to_hbm [thread:$0]  %s36, 512, %s1, [#allocation4]
    $region13: #{tpu_custom_call.1} parent=1 // pred_fallthru
      _
    // Predicated region
    $region14: #{tpu_custom_call.1} parent=1 // pred_check
      _
    $region15: #{tpu_custom_call.1} parent=1 // pred_check_branch
      %40 = sbr.rel (0) target = $region17
    $region16: #{tpu_custom_call.1} parent=1 // pred_region
      %41 = dma.done [#allocation4], 512
    $region17: #{tpu_custom_call.1} parent=1 // pred_fallthru
      _
    %42 = vsyncpa [#allocation3], 1
    %43 = vsyncpa [#allocation4], 1

</llo_original>
